<compile_context>
chip_gen: v7x
topology: tpu7x:2x2x1
jax: 0.10.0
libtpu: 0.0.40
codegen_flags: <defaults>
</compile_context>

<pallas_src>
import functools

import jax
import jax.numpy as jnp
from jax.experimental import pallas as pl
from jax.experimental.pallas import tpu as pltpu


def _round_up(x: int, m: int) -> int:
    return ((x + m - 1) // m) * m


def _sublane_multiple(itemsize: int) -> int:
    # Native packed sublane tile: 8 for 32-bit, 16 for 16-bit, 32 for 8-bit.
    return {4: 8, 2: 16, 1: 32}.get(itemsize, 8)


_TARGET_TILE_BYTES = 8 << 20   # ~8 MiB per input buffer (double-buffered)
_MAX_TILE_BYTES = 20 << 20     # safety clamp: 2 buffers + slack stays < 48 MiB
_TINY_BYTES = 512 << 10        # below this, a fused XLA reduce is as fast


def _mean_pred_len_kernel(preds_ref, out_ref, minlen_ref, *,
                          eos_idx: int, B: int, S: int, TB: int, TS: int):
    i = pl.program_id(0)                      # batch-tile index  ("parallel")
    k = pl.program_id(1)                      # seq-tile index    ("arbitrary")

    # Init per-row running minimum.  Sentinel S == "no EOS seen yet", and it
    # is also the correct length for rows with no EOS at all.
    @pl.when(k == 0)
    def _():
        minlen_ref[...] = jnp.full((TB, 1), S, dtype=jnp.int32)

    preds = preds_ref[...]                                  # (TB, TS), native dtype
    eos = jnp.asarray(eos_idx, dtype=preds.dtype)           # wrapper guarantees fit

    # Tile-LOCAL column indices only (constant across grid steps).  No padding
    # mask here: padded columns (global index >= S) can only produce
    # candidates >= S below, which never beat the sentinel S.
    col = jax.lax.broadcasted_iota(jnp.int32, (TB, TS), 1)
    masked = jnp.where(preds == eos, col, jnp.int32(TS))    # TS == "not EOS"
    tile_min = jnp.min(masked, axis=1, keepdims=True)       # (TB, 1)

    # Cheap (TB, 1) fix-up: tile-local min -> global column candidate.
    cand = jnp.where(tile_min == TS, jnp.int32(S), tile_min + k * TS)
    minlen_ref[...] = jnp.minimum(minlen_ref[...], cand)

    # Finalize this batch tile: mask padded rows, emit lane-dense partial sum.
    @pl.when(k == pl.num_programs(1) - 1)
    def _():
        row = jax.lax.broadcasted_iota(jnp.int32, (TB, 1), 0) + i * TB
        lens = jnp.where(row < B, minlen_ref[...], 0).astype(jnp.float32)
        partial = jnp.sum(lens)                              # scalar f32
        r8 = jax.lax.broadcasted_iota(jnp.int32, (8, 128), 0)
        c128 = jax.lax.broadcasted_iota(jnp.int32, (8, 128), 1)
        out_ref[...] = jnp.where((r8 == 0) & (c128 == 0), partial, jnp.float32(0.0))


def _mean_pred_len_ref(preds: jax.Array, eos_idx: int) -> jax.Array:
    """Pure-JAX reference (also the tiny-input fast path)."""
    B, S = preds.shape
    if jnp.issubdtype(preds.dtype, jnp.integer):
        info = jnp.iinfo(preds.dtype)
        if not (info.min <= eos_idx <= info.max):
            return jnp.float32(S)
    is_eos = preds == jnp.asarray(eos_idx, dtype=preds.dtype)
    first = jnp.argmax(is_eos.astype(jnp.int32), axis=1)
    lens = jnp.where(is_eos.any(axis=1), first, S).astype(jnp.float32)
    return lens.mean()


def mean_pred_len(preds: jax.Array, eos_idx: int, *,
                  block_b: int = 512, block_s: int = 32768,
                  force_pallas: bool = False) -> jax.Array:
    """Pallas equivalent of MeanPredLen(eos_idx).forward(preds)."""
    assert preds.ndim == 2
    B, S = preds.shape
    if B == 0:
        return jnp.float32(jnp.nan)          # torch .mean() over empty batch
    if S == 0:
        return jnp.float32(0.0)

    # 64-bit tokens (PyTorch LongTensor semantics) -> int32: the kernel is
    # purely HBM-bandwidth bound, so this halves wall time.  Token ids are
    # assumed to fit in int32.
    if jnp.issubdtype(preds.dtype, jnp.integer) and preds.dtype.itemsize == 8:
        preds = preds.astype(jnp.int32)

    # eos_idx not representable in the token dtype => no token can match
    # (PyTorch's comparison promotes -> all False), so every length is S.
    if jnp.issubdtype(preds.dtype, jnp.integer):
        info = jnp.iinfo(preds.dtype)
        if not (info.min <= eos_idx <= info.max):
            return jnp.float32(S)

    itemsize = preds.dtype.itemsize
    # Tiny inputs: fixed pallas_call dispatch cost dominates -> pure jnp.
    if not force_pallas and B * S * itemsize < _TINY_BYTES:
        return _mean_pred_len_ref(preds, eos_idx)

    # ---- tile selection -----------------------------------------------------
    sub = _sublane_multiple(itemsize)
    b_pad = _round_up(B, sub)
    cap_b = max(sub, (min(block_b, b_pad) // sub) * sub)
    # Prefer n_b >= 2: the batch axis is the only "parallel" axis, so this
    # keeps both v7x TensorCores busy (no effect on single-TC v5e/v6e).
    pref_b = _round_up(-(-B // 2), sub)
    TB = min(cap_b, pref_b)

    s_pad = _round_up(S, 128)
    cap_s = max(128, (block_s // 128) * 128)
    ts_target = _round_up(-(-_TARGET_TILE_BYTES // (TB * itemsize)), 128)
    TS = min(s_pad, cap_s, ts_target)
    if TB * TS * itemsize > _MAX_TILE_BYTES:      # only if user passes huge caps
        TS = max(128, (_MAX_TILE_BYTES // (TB * itemsize) // 128) * 128)

    n_b = -(-B // TB)
    n_s = -(-S // TS)
    tile_bytes = TB * TS * itemsize
    # Cover 2x double-buffered input tiles + output blocks + scratch + slack.
    # (32 MiB floor is safe on v5e/v6e/v7x; v7x physical VMEM is 64 MiB/TC.)
    vmem_limit = int(max(32 << 20, 2 * tile_bytes + (4 << 20)))

    kernel = functools.partial(_mean_pred_len_kernel,
                               eos_idx=eos_idx, B=B, S=S, TB=TB, TS=TS)

    partials = pl.pallas_call(
        kernel,
        out_shape=jax.ShapeDtypeStruct((n_b * 8, 128), jnp.float32),
        grid_spec=pltpu.PrefetchScalarGridSpec(
            num_scalar_prefetch=0,
            grid=(n_b, n_s),
            in_specs=[pl.BlockSpec((TB, TS), lambda i, k: (i, k))],
            out_specs=pl.BlockSpec((8, 128), lambda i, k: (i, 0)),
            scratch_shapes=[pltpu.VMEM((TB, 1), jnp.int32)],
        ),
        compiler_params=pltpu.CompilerParams(
            dimension_semantics=("parallel", "arbitrary"),
            vmem_limit_bytes=vmem_limit,
        ),
    )(preds)

    # Only element [i*8, 0] of each batch-tile block is non-zero; sum all.
    # TODO(synk): PyTorch returns a host Python float via .item(); here a jnp
    # f32 scalar is returned (call float() on it for identical behavior).
    return jnp.sum(partials) / jnp.float32(B)


if __name__ == "__main__":
    key = jax.random.PRNGKey(0)
    k1, k2, k3 = jax.random.split(key, 3)

    # Case 1: tiny shape from the module spec, forced through the Pallas path.
    preds_small = jax.random.randint(k1, (2, 8), 0, 10, dtype=jnp.int32)
    eos_small = 9
    out_small = mean_pred_len(preds_small, eos_small, force_pallas=True)
    jax.block_until_ready(out_small)
    ref_small = _mean_pred_len_ref(preds_small, eos_small)
    assert jnp.allclose(out_small, ref_small), (float(out_small), float(ref_small))

    # Case 2: non-multiple shape with a multi-tile grid on both axes
    # (exercises row/column padding, the tile-local -> global fix-up across
    # sequence tiles, and the running min in scratch).
    B2, S2, vocab2, eos2 = 37, 300, 50, 7
    preds_big = jax.random.randint(k2, (B2, S2), 0, vocab2, dtype=jnp.int32)
    # Row 0: guaranteed no EOS -> length S2.  Row 1: early EOS at position 3.
    preds_big = preds_big.at[0].set(
        jnp.where(preds_big[0] == eos2, eos2 + 1, preds_big[0]))
    preds_big = preds_big.at[1, 3].set(eos2)
    out_big = mean_pred_len(preds_big, eos2, block_b=16, block_s=128)
    jax.block_until_ready(out_big)
    ref_big = _mean_pred_len_ref(preds_big, eos2)
    assert jnp.allclose(out_big, ref_big), (float(out_big), float(ref_big))

    # Case 3: default block sizes with the automatic n_b >= 2 batch split
    # (two "parallel" batch tiles, single sequence tile).
    B3, S3, vocab3, eos3 = 64, 1024, 100, 11
    preds_mid = jax.random.randint(k3, (B3, S3), 0, vocab3, dtype=jnp.int32)
    preds_mid = preds_mid.at[0, 0].set(eos3)          # EOS at position 0
    preds_mid = preds_mid.at[5].set(                  # row with no EOS at all
        jnp.where(preds_mid[5] == eos3, eos3 + 1, preds_mid[5]))
    out_mid = mean_pred_len(preds_mid, eos3, force_pallas=True)
    jax.block_until_ready(out_mid)
    ref_mid = _mean_pred_len_ref(preds_mid, eos3)
    assert jnp.allclose(out_mid, ref_mid), (float(out_mid), float(ref_mid))

    print("KERNEL_OK")
</pallas_src>

<mosaic_0001>
module attributes {stable_mosaic.version = 11 : i64} {
  func.func @_mean_pred_len_kernel(%arg0: i32, %arg1: i32, %arg2: memref<8x128xi32, #tpu.memory_space<vmem>>, %arg3: memref<8x128xf32, #tpu.memory_space<vmem>>, %arg4: memref<8x1xi32, #tpu.memory_space<vmem>>) attributes {dimension_semantics = [#tpu.dimension_semantics<parallel>, #tpu.dimension_semantics<arbitrary>], iteration_bounds = array<i64: 1, 1>, scalar_prefetch = 0 : i64, scratch_operands = 1 : i64, tpu.core_type = #tpu.core_type<tc>, window_params = [{transform_indices = @transform_0, window_bounds = array<i64: 8, 128>}, {transform_indices = @transform_1, window_bounds = array<i64: 8, 128>}]} {
    %c0_i32 = arith.constant 0 : i32
    %0 = arith.cmpi eq, %arg1, %c0_i32 : i32
    %1 = arith.extui %0 : i1 to i32
    %c0_i32_0 = arith.constant 0 : i32
    %2 = arith.cmpi ne, %1, %c0_i32_0 : i32
    scf.if %2 {
      %c8_i32_10 = arith.constant 8 : i32
      %24 = vector.broadcast %c8_i32_10 : i32 to vector<8x1xi32>
      %c0_11 = arith.constant 0 : index
      %c0_12 = arith.constant 0 : index
      %25 = vector.load %arg4[%c0_11, %c0_12] : memref<8x1xi32, #tpu.memory_space<vmem>>, vector<8x1xi32>
      tpu.vector_store %arg4[%c0_11, %c0_12], %24 {strides = array<i32>} : memref<8x1xi32, #tpu.memory_space<vmem>>, vector<8x1xi32>,
    } else {
    }
    %c0 = arith.constant 0 : index
    %c0_1 = arith.constant 0 : index
    %3 = vector.load %arg2[%c0, %c0_1] : memref<8x128xi32, #tpu.memory_space<vmem>>, vector<8x128xi32>
    %4 = tpu.iota {dimensions = array<i32: 1>} : vector<8x128xi32>
    %c9_i32 = arith.constant 9 : i32
    %5 = vector.broadcast %c9_i32 : i32 to vector<8x128xi32>
    %6 = arith.cmpi eq, %3, %5 : vector<8x128xi32>
    %c128_i32 = arith.constant 128 : i32
    %7 = vector.broadcast %c128_i32 : i32 to vector<8x128xi32>
    %8 = arith.select %6, %4, %7 : vector<8x128xi1>, vector<8x128xi32>
    %cst = arith.constant dense<2147483647> : vector<8xi32>
    %9 = vector.multi_reduction <minsi>, %8, %cst [1] : vector<8x128xi32> to vector<8xi32>
    %10 = vector.shape_cast %9 : vector<8xi32> to vector<8x1xi32>
    %c128_i32_2 = arith.constant 128 : i32
    %11 = vector.broadcast %c128_i32_2 : i32 to vector<8x1xi32>
    %12 = arith.cmpi eq, %10, %11 : vector<8x1xi32>
    %c128_i32_3 = arith.constant 128 : i32
    %13 = arith.muli %arg1, %c128_i32_3 : i32
    %14 = vector.broadcast %13 : i32 to vector<8x1xi32>
    %15 = arith.addi %10, %14 : vector<8x1xi32>
    %c8_i32 = arith.constant 8 : i32
    %16 = vector.broadcast %c8_i32 : i32 to vector<8x1xi32>
    %17 = arith.select %12, %16, %15 : vector<8x1xi1>, vector<8x1xi32>
    %c0_4 = arith.constant 0 : index
    %c0_5 = arith.constant 0 : index
    %18 = vector.load %arg4[%c0_4, %c0_5] : memref<8x1xi32, #tpu.memory_space<vmem>>, vector<8x1xi32>
    %19 = arith.minsi %18, %17 : vector<8x1xi32>
    %c0_6 = arith.constant 0 : index
    %c0_7 = arith.constant 0 : index
    %20 = vector.load %arg4[%c0_6, %c0_7] : memref<8x1xi32, #tpu.memory_space<vmem>>, vector<8x1xi32>
    tpu.vector_store %arg4[%c0_6, %c0_7], %19 {strides = array<i32>} : memref<8x1xi32, #tpu.memory_space<vmem>>, vector<8x1xi32>,
    %c0_i32_8 = arith.constant 0 : i32
    %21 = arith.cmpi eq, %arg1, %c0_i32_8 : i32
    %22 = arith.extui %21 : i1 to i32
    %c0_i32_9 = arith.constant 0 : i32
    %23 = arith.cmpi ne, %22, %c0_i32_9 : i32
    scf.if %23 {
      %24 = tpu.iota {dimensions = array<i32: 0>} : vector<8x1xi32>
      %c8_i32_10 = arith.constant 8 : i32
      %25 = arith.muli %arg0, %c8_i32_10 : i32
      %26 = vector.broadcast %25 : i32 to vector<8x1xi32>
      %27 = arith.addi %24, %26 : vector<8x1xi32>
      %c2_i32 = arith.constant 2 : i32
      %28 = vector.broadcast %c2_i32 : i32 to vector<8x1xi32>
      %29 = arith.cmpi slt, %27, %28 : vector<8x1xi32>
      %c0_11 = arith.constant 0 : index
      %c0_12 = arith.constant 0 : index
      %30 = vector.load %arg4[%c0_11, %c0_12] : memref<8x1xi32, #tpu.memory_space<vmem>>, vector<8x1xi32>
      %c0_i32_13 = arith.constant 0 : i32
      %31 = vector.broadcast %c0_i32_13 : i32 to vector<8x1xi32>
      %32 = arith.select %29, %30, %31 : vector<8x1xi1>, vector<8x1xi32>
      %33 = arith.sitofp %32 : vector<8x1xi32> to vector<8x1xf32>
      %34 = vector.shape_cast %33 : vector<8x1xf32> to vector<1x8x1xf32>
      %cst_14 = arith.constant dense<0.000000e+00> : vector<1xf32>
      %35 = vector.multi_reduction <add>, %34, %cst_14 [1, 2] : vector<1x8x1xf32> to vector<1xf32>
      %36 = vector.shape_cast %35 : vector<1xf32> to vector<1x1x1xf32>
      %37 = vector.extract %36[0, 0, 0] : f32 from vector<1x1x1xf32>
      %38 = tpu.iota {dimensions = array<i32: 0>} : vector<8x128xi32>
      %39 = tpu.iota {dimensions = array<i32: 1>} : vector<8x128xi32>
      %c0_i32_15 = arith.constant 0 : i32
      %40 = vector.broadcast %c0_i32_15 : i32 to vector<8x128xi32>
      %41 = arith.cmpi eq, %38, %40 : vector<8x128xi32>
      %c0_i32_16 = arith.constant 0 : i32
      %42 = vector.broadcast %c0_i32_16 : i32 to vector<8x128xi32>
      %43 = arith.cmpi eq, %39, %42 : vector<8x128xi32>
      %44 = arith.andi %41, %43 : vector<8x128xi1>
      %cst_17 = arith.constant 0.000000e+00 : f32
      %45 = vector.broadcast %37 : f32 to vector<8x128xf32>
      %46 = vector.broadcast %cst_17 : f32 to vector<8x128xf32>
      %47 = arith.select %44, %45, %46 : vector<8x128xi1>, vector<8x128xf32>
      %c0_18 = arith.constant 0 : index
      %c0_19 = arith.constant 0 : index
      %48 = vector.load %arg3[%c0_18, %c0_19] : memref<8x128xf32, #tpu.memory_space<vmem>>, vector<8x128xf32>
      tpu.vector_store %arg3[%c0_18, %c0_19], %47 {strides = array<i32>} : memref<8x128xf32, #tpu.memory_space<vmem>>, vector<8x128xf32>,
    } else {
    }
    return
  }
  func.func @transform_0(%arg0: i32, %arg1: i32) -> (i32, i32) {
    %c0_i32 = arith.constant 0 : i32
    return %arg0, %arg1 : i32, i32
  }
  func.func @transform_1(%arg0: i32, %arg1: i32) -> (i32, i32) {
    %c0_i32 = arith.constant 0 : i32
    %c0_i32_0 = arith.constant 0 : i32
    return %arg0, %c0_i32 : i32, i32
  }
}

</mosaic_0001>

<llo_original>
// kernel: tpu_custom_call.1
$region0: #{tpu_custom_call.1}
  #allocation0 [shape = 'u32[]', space=smem, size = 0x4, offset = 0x4, fixed_abs, tag = 'smem constant byte address 0x4 - core index']
  #allocation1 [shape = 'u32[144,128]{1,0:T(1,128)}', space=vmem, size = 0x12000, scoped, tag = 'internal scratch']
  #allocation2 [shape = 's32[8,1]{1,0:T(8,128)}', space=vmem, size = 0x1000, scoped, tag = 'scratch operand']
  %s0 = inlined_call_operand.hbm [shape: s32[2,8], index: 0, kind: input, shape index: {}]
  %s1 = inlined_call_operand.hbm [shape: f32[8,128], index: 1, kind: output, shape index: {}]
  %s2 = sld [smem:[#allocation0]]
  $region26: #{tpu_custom_call.1} parent=0
    _
  %s4 = ssub.s32 1, %s2
  %s5 = scalar_select 0, %s4, %s2
  $region1: #{tpu_custom_call.1} parent=0
    #allocation3 [shape = 'u8[4096]{0}', space=vmem, size = 0x1000, scoped, tag = 'input window, operand 0, single buffered']
    #allocation4 [shape = 's32[1]{0}', space=sflag, size = 0x4, scoped, tag = 'scoped memory for tpu_custom_call.1']
    #allocation5 [shape = 's32[1]{0}', space=sflag, size = 0x4, scoped, tag = 'scoped memory for tpu_custom_call.1']
    #allocation6 [shape = 'u8[4096]{0}', space=vmem, size = 0x1000, scoped, tag = 'output window, operand 0, single buffered']
    %6 = vsyncpa [#allocation4], 0
    %7 = vsyncpa [#allocation5], 0
    // Predicated region
    $region2: #{tpu_custom_call.1} parent=1 // pred_check
      _
    $region3: #{tpu_custom_call.1} parent=1 // pred_check_branch
      %9 = sbr.rel (0) target = $region5
    $region4: #{tpu_custom_call.1} parent=1 // pred_region
      %s11 = ssub.s32 128, 32
      %12 = vsyncadd [#allocation4], %s11
      %s13 = sshll.u32 [#allocation3], 4
      %s14 = int_to_ptr.vmem [resolvable:$true] %s13
      %19 = dma.hbm_to_vmem [thread:$0]  %s0, 32, %s14, [#allocation4], 32, 32, 2
    $region5: #{tpu_custom_call.1} parent=1 // pred_fallthru
      _
    // Predicated region
    $region6: #{tpu_custom_call.1} parent=1 // pred_check
      _
    $region7: #{tpu_custom_call.1} parent=1 // pred_check_branch
      %21 = sbr.rel (0) target = $region9
    $region8: #{tpu_custom_call.1} parent=1 // pred_region
      %22 = dma.done [#allocation4], 128
    $region9: #{tpu_custom_call.1} parent=1 // pred_fallthru
      _
    %p23 = scmp.eq.s32.totalorder 0, 0
    // Predicated region
    $region10: #{tpu_custom_call.1} parent=1 // pred_check
      %p24 = pneg %p23
    $region11: #{tpu_custom_call.1} parent=1 // pred_check_branch
      %26 = sbr.rel (%p24) target = $region13
    $region12: #{tpu_custom_call.1} parent=1 // pred_region
      %vm27 = vcmask 7168
      %28 = vst.msk [vmem:[#allocation2] sm:$0xff] %vm27, 8
    $region13: #{tpu_custom_call.1} parent=1 // pred_fallthru
      _
    %v29 = vld [vmem:[#allocation3] sm:$0xff]
    %v30 = vlaneseq
    %v31 = vand.u32 %v30, 127
    %vm32 = vcmp.eq.s32.totalorder %v29, 9
    %v33 = vsel %vm32, %v31, 128
    %v34 = vand.u32 %v33, 65535
    %v35 = vshra.s32 %v33, 16
    %v36 = vcvt.s32.f32 %v34
    %v37 = vcvt.s32.f32 %v35
    %38 = vmin.xlane.f32.xlu0 %v37
    %v39 = vpop.xlane.xlu0 %38
    %vm40 = vcmp.eq.f32.partialorder %v37, %v39
    %v41 = vsel %vm40, %v36, inf
    %42 = vmin.xlane.f32.xlu0 %v41
    %v43 = vpop.xlane.xlu0 %42
    %v44 = vcvt.f32.s32 %v43
    %v45 = vcvt.f32.s32 %v39
    %v46 = vshll.u32 %v45, 16
    %v47 = vadd.s32 %v46, %v44
    %vm48 = vcmp.eq.s32.totalorder %v47, 128
    %s49 = smul.u32 0, 128
    %v50 = vstv %s49
    %v51 = vadd.s32 %v47, %v50
    %v52 = vsel %vm48, 8, %v51
    %v53 = vld [vmem:[#allocation2] sm:$0xff]
    %vm54 = vcmp.lt.s32.totalorder %v53, %v52
    %v55 = vsel %vm54, %v53, %v52
    %vm56 = vcmask 7168
    %57 = vst.msk [vmem:[#allocation2] sm:$0xff] %vm56, %v55
    // Predicated region
    $region14: #{tpu_custom_call.1} parent=1 // pred_check
      %p58 = pneg %p23
    $region15: #{tpu_custom_call.1} parent=1 // pred_check_branch
      %60 = sbr.rel (%p58) target = $region17
    $region16: #{tpu_custom_call.1} parent=1 // pred_region
      %v61 = vlaneseq
      %v62 = vshrl.u32 %v61, 7
      %s63 = smul.u32 0, 8
      %v64 = vstv %s63
      %v65 = vadd.s32 %v62, %v64
      %vm66 = vcmp.lt.s32.totalorder %v65, 2
      %v67 = vld [vmem:[#allocation2] sm:$0xff]
      %v68 = vsel %vm66, %v67, 0
      %v69 = vcvt.s32.f32 %v68
      %v70 = vsel %vm56, %v69, 0.0
      %71 = vadd.xlane.f32.xlu0 %v70
      %v72 = vpop.xlane.xlu0 %71
      %v73 = vrot.slane %v72, 4
      %v74 = vadd.f32 %v72, %v73
      %v75 = vrot.slane %v74, 2
      %v76 = vadd.f32 %v74, %v75
      %v77 = vrot.slane %v76, 1
      %v78 = vadd.f32 %v76, %v77
      %s79 = vtos %v78
      %vm80 = vcmp.eq.s32.totalorder %v62, 0
      %vm81 = vcmp.eq.s32.totalorder %v31, 0
      %vm82 = vmand %vm80, %vm81
      %v83 = vstv %s79
      %v84 = vsel %vm82, %v83, 0.0
      %85 = vst [vmem:[#allocation6] sm:$0xff] %v84
    $region17: #{tpu_custom_call.1} parent=1 // pred_fallthru
      _
    // Predicated region
    $region18: #{tpu_custom_call.1} parent=1 // pred_check
      _
    $region19: #{tpu_custom_call.1} parent=1 // pred_check_branch
      %87 = sbr.rel (0) target = $region21
    $region20: #{tpu_custom_call.1} parent=1 // pred_region
      %s89 = ssub.s32 128, 128
      %90 = vsyncadd [#allocation5], %s89
      %s92 = sshll.u32 [#allocation6], 4
      %s93 = int_to_ptr.vmem [resolvable:$true] %s92
      %95 = dma.vmem_to_hbm [thread:$0]  %s93, 128, %s1, [#allocation5]
    $region21: #{tpu_custom_call.1} parent=1 // pred_fallthru
      _
    // Predicated region
    $region22: #{tpu_custom_call.1} parent=1 // pred_check
      _
    $region23: #{tpu_custom_call.1} parent=1 // pred_check_branch
      %97 = sbr.rel (0) target = $region25
    $region24: #{tpu_custom_call.1} parent=1 // pred_region
      %98 = dma.done [#allocation5], 128
    $region25: #{tpu_custom_call.1} parent=1 // pred_fallthru
      _
    %99 = vsyncpa [#allocation4], 1
    %100 = vsyncpa [#allocation5], 1

</llo_original>
